<compile_context>
chip_gen: v7x
topology: tpu7x:2x2x1
jax: 0.10.0
libtpu: 0.0.40
codegen_flags: <defaults>
</compile_context>

<pallas_src>
import math

import jax
import jax.numpy as jnp
from jax.experimental import pallas as pl
from jax.experimental.pallas import tpu as pltpu

LANE = 128
SUBLANE = 8
MAX_TM = 4096                    # rows per block -> 2 MiB f32 tile per input
VMEM_LIMIT = 48 * 1024 * 1024    # 2 inputs x 2 bufs x tile + temporaries, < 64 MiB


def _stream_dtype(dt):
    """Narrowest dtype we can stream through the kernel without changing values."""
    dt = jnp.dtype(dt)
    if dt == jnp.dtype(jnp.bool_):
        return jnp.dtype(jnp.int8)                       # 0/1 multi-hot, 1 B/elem
    if dt.itemsize > 4:                                  # f64 / i64 (x64 mode)
        return (jnp.dtype(jnp.float32) if jnp.issubdtype(dt, jnp.floating)
                else jnp.dtype(jnp.int32))
    return dt


def _row_granule(*dtypes):
    """Sublane row granule of the narrowest streamed dtype (8 / 16 / 32 rows)."""
    min_item = min(jnp.dtype(d).itemsize for d in dtypes)
    return SUBLANE * (4 // min_item)


def _bce_with_logits_f32(x, y):
    """Stable BCE-with-logits, computed in f32 regardless of input dtypes."""
    x = x.astype(jnp.float32)
    y = y.astype(jnp.float32)
    return jnp.maximum(x, 0.0) - x * y + jnp.log1p(jnp.exp(-jnp.abs(x)))


def _bce_none_kernel(x_ref, y_ref, o_ref):
    o_ref[...] = _bce_with_logits_f32(x_ref[...], y_ref[...]).astype(o_ref.dtype)


def _make_sum_kernel(tm, rows_valid_last, bps, total_blocks, needs_mask):
    """Streaming-sum kernel. Grid = (n_slices, blocks_per_slice)."""
    last_blk = total_blocks - 1
    n_sub = tm // SUBLANE

    def acc_add(acc_ref, loss):
        # (tm,128) -> (tm/8, 8, 128) is vreg-tile aligned (free); the leading-axis
        # sum is a pure VPU tree-add into one (8,128) tile -- no full-tile
        # accumulator load/store per block, no XLU work until slice end.
        acc_ref[...] += loss.reshape(n_sub, SUBLANE, LANE).sum(axis=0)

    def kernel(x_ref, y_ref, part_ref, acc_ref):
        s = pl.program_id(0)        # slice (parallel; split across TCs on v7x)
        j = pl.program_id(1)        # block within slice (sequential)

        @pl.when(j == 0)
        def _():
            acc_ref[...] = jnp.zeros_like(acc_ref)

        loss = _bce_with_logits_f32(x_ref[...], y_ref[...])

        if needs_mask:
            blk = s * bps + j

            @pl.when(blk < last_blk)
            def _():
                acc_add(acc_ref, loss)

            @pl.when(blk == last_blk)
            def _():
                # Only the last real block can contain invalid (past-the-end) rows.
                row = jax.lax.broadcasted_iota(jnp.int32, (tm, LANE), 0)
                acc_add(acc_ref, jnp.where(row < rows_valid_last, loss, 0.0))
            # Phantom grid steps (odd block count split over 2 slices) have
            # blk > last_blk: neither branch fires, nothing is accumulated.
        else:
            acc_add(acc_ref, loss)

        @pl.when(j == bps - 1)
        def _():
            part_ref[0, 0] = jnp.sum(acc_ref[...])

    return kernel


def _pick_tm(m, granule, max_rows):
    max_rows = max(granule, (max_rows // granule) * granule)
    return m if m <= max_rows else max_rows


def cross_entropy_loss(logits, labels, reduction="mean", *,
                       max_rows_per_block=MAX_TM):
    """JAX/Pallas equivalent of gcpds CrossEntropyLoss (BCEWithLogitsLoss)."""
    assert logits.shape == labels.shape
    assert reduction in ("mean", "sum", "none")

    # Logits must be floating; never widen beyond f32.
    x_dt = jnp.dtype(logits.dtype)
    if not jnp.issubdtype(x_dt, jnp.floating) or x_dt.itemsize > 4:
        logits = logits.astype(jnp.float32)

    # Labels: stream at (at most) their arrival width; the kernel upcasts to
    # f32 (mirrors `labels.float()` numerically -- values are 0/1).
    y_dt = _stream_dtype(labels.dtype)
    if y_dt != jnp.dtype(labels.dtype):
        labels = labels.astype(y_dt)

    shape = logits.shape
    out_dtype = logits.dtype
    n = int(math.prod(shape)) if shape else 1

    granule = _row_granule(logits.dtype, labels.dtype)
    chunk = granule * LANE
    n_main = (n // chunk) * chunk       # aligned prefix -> kernel (no pad copy)
    m = n_main // LANE                  # slab rows (multiple of granule)
    n_tail = n - n_main                 # short ragged tail -> plain jnp

    flat_x = logits.reshape(-1)
    flat_y = labels.reshape(-1)

    tail_loss = None
    if n_tail:
        tail_loss = _bce_with_logits_f32(flat_x[n_main:], flat_y[n_main:])

    # -------------------------------------------------------------- 'none' --
    if reduction == "none":
        pieces = []
        if m > 0:
            tm = _pick_tm(m, granule, max_rows_per_block)
            num_blocks = -(-m // tm)
            x2 = flat_x[:n_main].reshape(m, LANE)
            y2 = flat_y[:n_main].reshape(m, LANE)
            in_bytes = x2.size * x2.dtype.itemsize + y2.size * y2.dtype.itemsize
            out = pl.pallas_call(
                _bce_none_kernel,
                out_shape=jax.ShapeDtypeStruct((m, LANE), out_dtype),
                grid=(num_blocks,),
                in_specs=[pl.BlockSpec((tm, LANE), lambda i: (i, 0)),
                          pl.BlockSpec((tm, LANE), lambda i: (i, 0))],
                out_specs=pl.BlockSpec((tm, LANE), lambda i: (i, 0)),
                compiler_params=pltpu.CompilerParams(
                    dimension_semantics=("parallel",),
                    vmem_limit_bytes=VMEM_LIMIT),
                cost_estimate=pl.CostEstimate(
                    flops=5 * n_main, transcendentals=2 * n_main,
                    bytes_accessed=in_bytes + n_main * jnp.dtype(out_dtype).itemsize),
            )(x2, y2)
            if n_tail == 0:
                return out.reshape(shape)
            pieces.append(out.reshape(-1))
        if tail_loss is not None:
            pieces.append(tail_loss.astype(out_dtype))
        return jnp.concatenate(pieces).reshape(shape)

    # --------------------------------------------------- 'sum' / 'mean' -----
    tail_sum = jnp.sum(tail_loss) if tail_loss is not None else jnp.float32(0.0)

    if m == 0:
        total = tail_sum
    else:
        tm = _pick_tm(m, granule, max_rows_per_block)
        total_blocks = -(-m // tm)
        # Always split into 2 slices when possible so v7x can use both
        # TensorCores, even for odd block counts (-> one phantom grid step).
        if total_blocks >= 2:
            n_slices = 2
            bps = -(-total_blocks // 2)
        else:
            n_slices, bps = 1, 1
        phantom = n_slices * bps != total_blocks
        rows_valid_last = m - (total_blocks - 1) * tm     # == tm when tm | m
        needs_mask = phantom or (rows_valid_last != tm)

        x2 = flat_x[:n_main].reshape(m, LANE)
        y2 = flat_y[:n_main].reshape(m, LANE)
        in_bytes = x2.size * x2.dtype.itemsize + y2.size * y2.dtype.itemsize

        kernel = _make_sum_kernel(tm, rows_valid_last, bps, total_blocks, needs_mask)
        last_idx = total_blocks - 1

        def in_map(s, j):
            # Phantom steps re-target the last real block (harmless; often the
            # DMA is even skipped since the index repeats); the kernel guards
            # skip their accumulation.
            return (jnp.minimum(s * bps + j, last_idx), 0)

        # NOTE(v7x): worth sweeping pipeline_mode=pl.Buffered(3) on the input
        # specs once blocks are this large; default double-buffering kept here.
        partials = pl.pallas_call(
            kernel,
            out_shape=jax.ShapeDtypeStruct((n_slices, 1), jnp.float32),
            grid=(n_slices, bps),
            in_specs=[pl.BlockSpec((tm, LANE), in_map),
                      pl.BlockSpec((tm, LANE), in_map)],
            out_specs=pl.BlockSpec((1, 1), lambda s, j: (s, 0),
                                   memory_space=pltpu.SMEM),
            scratch_shapes=[pltpu.VMEM((SUBLANE, LANE), jnp.float32)],
            compiler_params=pltpu.CompilerParams(
                dimension_semantics=("parallel", "arbitrary"),
                vmem_limit_bytes=VMEM_LIMIT),
            cost_estimate=pl.CostEstimate(
                flops=5 * n_main, transcendentals=2 * n_main,
                bytes_accessed=in_bytes + 8 * n_slices),
        )(x2, y2)
        total = jnp.sum(partials) + tail_sum

    if reduction == "sum":
        return total
    return total / jnp.float32(n)


def _reference(logits, labels):
    x = logits.astype(jnp.float32)
    y = labels.astype(jnp.float32)
    return jnp.maximum(x, 0.0) - x * y + jnp.log1p(jnp.exp(-jnp.abs(x)))


if __name__ == "__main__":
    key = jax.random.PRNGKey(0)
    ks = jax.random.split(key, 10)

    # Shape implied by the module: (N, C, H, W) multi-hot segmentation labels.
    N, C, H, W = 2, 4, 16, 16
    logits = jax.random.normal(ks[0], (N, C, H, W), dtype=jnp.float32)
    labels = jax.random.bernoulli(ks[1], 0.5, (N, C, H, W)).astype(jnp.float32)
    ref = _reference(logits, labels)

    loss_mean = jax.block_until_ready(cross_entropy_loss(logits, labels, "mean"))
    loss_sum = jax.block_until_ready(cross_entropy_loss(logits, labels, "sum"))
    loss_none = jax.block_until_ready(cross_entropy_loss(logits, labels, "none"))
    assert loss_none.shape == logits.shape
    assert jnp.allclose(loss_none, ref, atol=1e-5, rtol=1e-5)
    assert jnp.allclose(loss_sum, jnp.sum(ref), atol=1e-3, rtol=1e-5)
    assert jnp.allclose(loss_mean, jnp.mean(ref), atol=1e-5, rtol=1e-5)

    # Narrow label streams (no wrapper widening): bf16 through the kernel,
    # bool (-> int8 stream / jnp fallback at this tiny size).
    mean_bf16 = jax.block_until_ready(
        cross_entropy_loss(logits, labels.astype(jnp.bfloat16), "mean"))
    assert jnp.allclose(mean_bf16, jnp.mean(ref), atol=1e-5, rtol=1e-5)
    labels_bool = jax.random.bernoulli(ks[2], 0.5, (N, C, H, W))
    ref_bool = _reference(logits, labels_bool)
    mean_bool = jax.block_until_ready(cross_entropy_loss(logits, labels_bool, "mean"))
    assert jnp.allclose(mean_bool, jnp.mean(ref_bool), atol=1e-5, rtol=1e-5)

    # Multi-block reduction paths at tiny size via max_rows_per_block:
    # odd block count -> 2 slices + phantom step; and a masked partial last block.
    lg2 = jax.random.normal(ks[3], (3, 1, 8, 128), dtype=jnp.float32)
    lb2 = jax.random.bernoulli(ks[4], 0.3, (3, 1, 8, 128)).astype(jnp.float32)
    ref2 = _reference(lg2, lb2)
    mean_odd = jax.block_until_ready(
        cross_entropy_loss(lg2, lb2, "mean", max_rows_per_block=8))
    sum_part = jax.block_until_ready(
        cross_entropy_loss(lg2, lb2, "sum", max_rows_per_block=16))
    assert jnp.allclose(mean_odd, jnp.mean(ref2), atol=1e-5, rtol=1e-5)
    assert jnp.allclose(sum_part, jnp.sum(ref2), atol=1e-3, rtol=1e-5)

    # Ragged sizes: aligned prefix through the kernel + short jnp tail.
    lg3 = jax.random.normal(ks[5], (1, 2, 9, 128), dtype=jnp.float32)   # 2304 elems
    lb3 = jax.random.bernoulli(ks[6], 0.5, (1, 2, 9, 128)).astype(jnp.float32)
    ref3 = _reference(lg3, lb3)
    mean3 = jax.block_until_ready(cross_entropy_loss(lg3, lb3, "mean"))
    none3 = jax.block_until_ready(cross_entropy_loss(lg3, lb3, "none"))
    assert jnp.allclose(mean3, jnp.mean(ref3), atol=1e-5, rtol=1e-5)
    assert jnp.allclose(none3, ref3, atol=1e-5, rtol=1e-5)

    lg4 = jax.random.normal(ks[7], (1, 3, 7, 11), dtype=jnp.float32)    # 231 elems
    lb4 = jax.random.bernoulli(ks[8], 0.5, (1, 3, 7, 11)).astype(jnp.float32)
    ref4 = _reference(lg4, lb4)
    mean4 = jax.block_until_ready(cross_entropy_loss(lg4, lb4, "mean"))
    none4 = jax.block_until_ready(cross_entropy_loss(lg4, lb4, "none"))
    assert jnp.allclose(mean4, jnp.mean(ref4), atol=1e-5, rtol=1e-5)
    assert jnp.allclose(none4, ref4, atol=1e-5, rtol=1e-5)

    print("KERNEL_OK")
</pallas_src>

<mosaic_0001>
module attributes {stable_mosaic.version = 11 : i64} {
  func.func @kernel(%arg0: i32, %arg1: i32, %arg2: memref<16x128xf32, #tpu.memory_space<vmem>>, %arg3: memref<16x128xf32, #tpu.memory_space<vmem>>, %arg4: memref<1x1xf32, #tpu.memory_space<smem>>, %arg5: memref<8x128xf32, #tpu.memory_space<vmem>>) attributes {dimension_semantics = [#tpu.dimension_semantics<parallel>, #tpu.dimension_semantics<arbitrary>], iteration_bounds = array<i64: 1, 1>, scalar_prefetch = 0 : i64, scratch_operands = 1 : i64, tpu.core_type = #tpu.core_type<tc>, window_params = [{transform_indices = @transform_0, window_bounds = array<i64: 16, 128>}, {transform_indices = @transform_1, window_bounds = array<i64: 16, 128>}, {transform_indices = @transform_2, window_bounds = array<i64: 1, 1>}]} {
    %c0_i32 = arith.constant 0 : i32
    %0 = arith.cmpi eq, %arg1, %c0_i32 : i32
    %1 = arith.extui %0 : i1 to i32
    %c0_i32_0 = arith.constant 0 : i32
    %2 = arith.cmpi ne, %1, %c0_i32_0 : i32
    scf.if %2 {
      %cst_12 = arith.constant 0.000000e+00 : f32
      %23 = vector.broadcast %cst_12 : f32 to vector<8x128xf32>
      %c0_13 = arith.constant 0 : index
      %c0_14 = arith.constant 0 : index
      %24 = vector.load %arg5[%c0_13, %c0_14] : memref<8x128xf32, #tpu.memory_space<vmem>>, vector<8x128xf32>
      tpu.vector_store %arg5[%c0_13, %c0_14], %23 {strides = array<i32>} : memref<8x128xf32, #tpu.memory_space<vmem>>, vector<8x128xf32>,
    } else {
    }
    %c0 = arith.constant 0 : index
    %c0_1 = arith.constant 0 : index
    %3 = vector.load %arg2[%c0, %c0_1] : memref<16x128xf32, #tpu.memory_space<vmem>>, vector<16x128xf32>
    %c0_2 = arith.constant 0 : index
    %c0_3 = arith.constant 0 : index
    %4 = vector.load %arg3[%c0_2, %c0_3] : memref<16x128xf32, #tpu.memory_space<vmem>>, vector<16x128xf32>
    %cst = arith.constant 0.000000e+00 : f32
    %5 = vector.broadcast %cst : f32 to vector<16x128xf32>
    %6 = arith.maximumf %3, %5 : vector<16x128xf32>
    %7 = arith.mulf %3, %4 : vector<16x128xf32>
    %8 = arith.subf %6, %7 : vector<16x128xf32>
    %9 = math.absf %3 : vector<16x128xf32>
    %cst_4 = arith.constant 0.000000e+00 : f32
    %10 = vector.broadcast %cst_4 : f32 to vector<16x128xf32>
    %11 = arith.subf %10, %9 : vector<16x128xf32>
    %12 = math.exp %11 : vector<16x128xf32>
    %13 = math.log1p %12 : vector<16x128xf32>
    %14 = arith.addf %8, %13 : vector<16x128xf32>
    %c0_5 = arith.constant 0 : index
    %c0_6 = arith.constant 0 : index
    %15 = vector.load %arg5[%c0_5, %c0_6] : memref<8x128xf32, #tpu.memory_space<vmem>>, vector<8x128xf32>
    %16 = vector.shape_cast %14 : vector<16x128xf32> to vector<2x8x128xf32>
    %cst_7 = arith.constant dense<0.000000e+00> : vector<8x128xf32>
    %17 = vector.multi_reduction <add>, %16, %cst_7 [0] : vector<2x8x128xf32> to vector<8x128xf32>
    %18 = arith.addf %15, %17 : vector<8x128xf32>
    %c0_8 = arith.constant 0 : index
    %c0_9 = arith.constant 0 : index
    %19 = vector.load %arg5[%c0_8, %c0_9] : memref<8x128xf32, #tpu.memory_space<vmem>>, vector<8x128xf32>
    tpu.vector_store %arg5[%c0_8, %c0_9], %18 {strides = array<i32>} : memref<8x128xf32, #tpu.memory_space<vmem>>, vector<8x128xf32>,
    %c0_i32_10 = arith.constant 0 : i32
    %20 = arith.cmpi eq, %arg1, %c0_i32_10 : i32
    %21 = arith.extui %20 : i1 to i32
    %c0_i32_11 = arith.constant 0 : i32
    %22 = arith.cmpi ne, %21, %c0_i32_11 : i32
    scf.if %22 {
      %c0_12 = arith.constant 0 : index
      %c0_13 = arith.constant 0 : index
      %23 = vector.load %arg5[%c0_12, %c0_13] : memref<8x128xf32, #tpu.memory_space<vmem>>, vector<8x128xf32>
      %24 = vector.shape_cast %23 : vector<8x128xf32> to vector<1x8x128xf32>
      %cst_14 = arith.constant dense<0.000000e+00> : vector<1xf32>
      %25 = vector.multi_reduction <add>, %24, %cst_14 [1, 2] : vector<1x8x128xf32> to vector<1xf32>
      %26 = vector.shape_cast %25 : vector<1xf32> to vector<1x1x1xf32>
      %27 = vector.extract %26[0, 0, 0] : f32 from vector<1x1x1xf32>
      %c0_15 = arith.constant 0 : index
      %c0_16 = arith.constant 0 : index
      %28 = memref.load %arg4[%c0_15, %c0_16] : memref<1x1xf32, #tpu.memory_space<smem>>
      memref.store %27, %arg4[%c0_15, %c0_16] : memref<1x1xf32, #tpu.memory_space<smem>>
    } else {
    }
    return
  }
  func.func @transform_0(%arg0: i32, %arg1: i32) -> (i32, i32) {
    %c1_i32 = arith.constant 1 : i32
    %0 = arith.muli %arg0, %c1_i32 : i32
    %1 = arith.addi %0, %arg1 : i32
    %c0_i32 = arith.constant 0 : i32
    %2 = arith.minsi %1, %c0_i32 : i32
    %c0_i32_0 = arith.constant 0 : i32
    %c0_i32_1 = arith.constant 0 : i32
    return %2, %c0_i32_0 : i32, i32
  }
  func.func @transform_1(%arg0: i32, %arg1: i32) -> (i32, i32) {
    %c1_i32 = arith.constant 1 : i32
    %0 = arith.muli %arg0, %c1_i32 : i32
    %1 = arith.addi %0, %arg1 : i32
    %c0_i32 = arith.constant 0 : i32
    %2 = arith.minsi %1, %c0_i32 : i32
    %c0_i32_0 = arith.constant 0 : i32
    %c0_i32_1 = arith.constant 0 : i32
    return %2, %c0_i32_0 : i32, i32
  }
  func.func @transform_2(%arg0: i32, %arg1: i32) -> (i32, i32) {
    %c0_i32 = arith.constant 0 : i32
    %c0_i32_0 = arith.constant 0 : i32
    return %arg0, %c0_i32 : i32, i32
  }
}

</mosaic_0001>

<llo_original>
// kernel: tpu_custom_call.1
$region0: #{tpu_custom_call.1}
  #allocation0 [shape = 'u32[]', space=smem, size = 0x4, offset = 0x4, fixed_abs, tag = 'smem constant byte address 0x4 - core index']
  #allocation1 [shape = 'u32[144,128]{1,0:T(1,128)}', space=vmem, size = 0x12000, scoped, tag = 'internal scratch']
  #allocation2 [shape = 'f32[8,128]{1,0:T(8,128)}', space=vmem, size = 0x1000, scoped, tag = 'scratch operand']
  %s0 = inlined_call_operand.hbm [shape: f32[16,128], index: 0, kind: input, shape index: {}]
  %s1 = inlined_call_operand.hbm [shape: f32[16,128], index: 1, kind: input, shape index: {}]
  %s2 = inlined_call_operand.hbm [shape: f32[1,1], index: 2, kind: output, shape index: {}]
  %s3 = sld [smem:[#allocation0]]
  $region34: #{tpu_custom_call.1} parent=0
    _
  %s5 = ssub.s32 1, %s3
  %s6 = scalar_select 0, %s5, %s3
  $region1: #{tpu_custom_call.1} parent=0
    #allocation3 [shape = 'u8[8192]{0}', space=vmem, size = 0x2000, scoped, tag = 'input window, operand 0, single buffered']
    #allocation4 [shape = 's32[1]{0}', space=sflag, size = 0x4, scoped, tag = 'scoped memory for tpu_custom_call.1']
    #allocation5 [shape = 's32[1]{0}', space=sflag, size = 0x4, scoped, tag = 'scoped memory for tpu_custom_call.1']
    #allocation6 [shape = 'u8[8192]{0}', space=vmem, size = 0x2000, scoped, tag = 'input window, operand 1, single buffered']
    #allocation7 [shape = 's32[1]{0}', space=sflag, size = 0x4, scoped, tag = 'scoped memory for tpu_custom_call.1']
    #allocation8 [shape = 'u8[512]{0}', space=smem, size = 0x200, scoped, tag = 'output window, operand 0, single buffered']
    %7 = vsyncpa [#allocation4], 0
    %8 = vsyncpa [#allocation7], 0
    %9 = vsyncpa [#allocation5], 0
    // Predicated region
    $region2: #{tpu_custom_call.1} parent=1 // pred_check
      _
    $region3: #{tpu_custom_call.1} parent=1 // pred_check_branch
      %11 = sbr.rel (0) target = $region5
    $region4: #{tpu_custom_call.1} parent=1 // pred_region
      %s12 = sadd.s32 0, 0
      %p13 = scmp.lt.s32.totalorder %s12, 0
      %s14 = scalar_select %p13, %s12, 0
      %s15 = smul.u32 2, %s14
      %s17 = ssub.s32 256, 256
      %18 = vsyncadd [#allocation4], %s17
      %s19 = smul.addr %s15, 128
      %s20 = scalar_lea.hbm %s0, %s19
      %s21 = sshll.u32 [#allocation3], 4
      %s22 = int_to_ptr.vmem [resolvable:$true] %s21
      %27 = dma.hbm_to_vmem [thread:$0]  %s20, 256, %s22, [#allocation4], 128, 128, 8
    $region5: #{tpu_custom_call.1} parent=1 // pred_fallthru
      _
    // Predicated region
    $region6: #{tpu_custom_call.1} parent=1 // pred_check
      _
    $region7: #{tpu_custom_call.1} parent=1 // pred_check_branch
      %29 = sbr.rel (0) target = $region9
    $region8: #{tpu_custom_call.1} parent=1 // pred_region
      %s30 = sadd.s32 0, 0
      %p31 = scmp.lt.s32.totalorder %s30, 0
      %s32 = scalar_select %p31, %s30, 0
      %s33 = smul.u32 2, %s32
      %s35 = ssub.s32 256, 256
      %36 = vsyncadd [#allocation7], %s35
      %s37 = smul.addr %s33, 128
      %s38 = scalar_lea.hbm %s1, %s37
      %s39 = sshll.u32 [#allocation6], 4
      %s40 = int_to_ptr.vmem [resolvable:$true] %s39
      %45 = dma.hbm_to_vmem [thread:$0]  %s38, 256, %s40, [#allocation7], 128, 128, 8
    $region9: #{tpu_custom_call.1} parent=1 // pred_fallthru
      _
    // Predicated region
    $region10: #{tpu_custom_call.1} parent=1 // pred_check
      _
    $region11: #{tpu_custom_call.1} parent=1 // pred_check_branch
      %47 = sbr.rel (0) target = $region13
    $region12: #{tpu_custom_call.1} parent=1 // pred_region
      %48 = dma.done [#allocation4], 256
    $region13: #{tpu_custom_call.1} parent=1 // pred_fallthru
      _
    // Predicated region
    $region14: #{tpu_custom_call.1} parent=1 // pred_check
      _
    $region15: #{tpu_custom_call.1} parent=1 // pred_check_branch
      %50 = sbr.rel (0) target = $region17
    $region16: #{tpu_custom_call.1} parent=1 // pred_region
      %51 = dma.done [#allocation7], 256
    $region17: #{tpu_custom_call.1} parent=1 // pred_fallthru
      _
    %s52 = sadd.s32 0, 0
    %p53 = scmp.lt.s32.totalorder %s52, 0
    %s54 = scalar_select %p53, %s52, 0
    %s55 = smul.u32 2, %s54
    %s56 = sadd.s32 0, 0
    %p57 = scmp.lt.s32.totalorder %s56, 0
    %s58 = scalar_select %p57, %s56, 0
    %s59 = smul.u32 2, %s58
    %p60 = scmp.eq.s32.totalorder 0, 0
    // Predicated region
    $region18: #{tpu_custom_call.1} parent=1 // pred_check
      %p61 = pneg %p60
    $region19: #{tpu_custom_call.1} parent=1 // pred_check_branch
      %63 = sbr.rel (%p61) target = $region21
    $region20: #{tpu_custom_call.1} parent=1 // pred_region
      %64 = vst [vmem:[#allocation2] sm:$0xff] 0.0
    $region21: #{tpu_custom_call.1} parent=1 // pred_fallthru
      _
    %v65 = vld [vmem:[#allocation3] sm:$0xff]
    %v66 = vld [vmem:[#allocation3 + $0x8] sm:$0xff]
    %v67 = vld [vmem:[#allocation6] sm:$0xff]
    %v68 = vld [vmem:[#allocation6 + $0x8] sm:$0xff]
    %v69 = vmax.f32 %v65, 0.0
    %v70 = vmax.f32 %v66, 0.0
    %v71 = vmul.f32 %v65, %v67
    %v72 = vmul.f32 %v66, %v68
    %v73 = vsub.f32 %v69, %v71
    %v74 = vsub.f32 %v70, %v72
    %v75 = vand.u32 2147483647, %v65
    %v76 = vand.u32 2147483647, %v66
    %v77 = vsub.f32 0.0, %v75
    %v78 = vsub.f32 0.0, %v76
    %v79 = vmul.f32 %v77, 1.442695
    %v80 = vpow.pop %v79
    %v81 = vmul.f32 %v78, 1.442695
    %v82 = vpow.pop %v81
    %v83 = vadd.f32 %v80, 1.0
    %v84 = vlog2.pop %v83
    %v85 = vmul.f32 %v84, 0.6931472
    %v86 = vmul.f32 -0.5, %v80
    %v87 = vadd.f32 %v86, 1.0
    %v88 = vmul.f32 %v87, %v80
    %v89 = vand.u32 2147483647, %v80
    %vm90 = vcmp.lt.f32.partialorder %v89, 0.0004427343
    %v91 = vsel %vm90, %v88, %v85
    %v92 = vadd.f32 %v82, 1.0
    %v93 = vlog2.pop %v92
    %v94 = vmul.f32 %v93, 0.6931472
    %v95 = vmul.f32 -0.5, %v82
    %v96 = vadd.f32 %v95, 1.0
    %v97 = vmul.f32 %v96, %v82
    %v98 = vand.u32 2147483647, %v82
    %vm99 = vcmp.lt.f32.partialorder %v98, 0.0004427343
    %v100 = vsel %vm99, %v97, %v94
    %v101 = vadd.f32 %v73, %v91
    %v102 = vadd.f32 %v74, %v100
    %v103 = vld [vmem:[#allocation2] sm:$0xff]
    %v104 = vadd.f32 %v101, %v102
    %v105 = vadd.f32 %v103, %v104
    %106 = vst [vmem:[#allocation2] sm:$0xff] %v105
    // Predicated region
    $region22: #{tpu_custom_call.1} parent=1 // pred_check
      %p107 = pneg %p60
    $region23: #{tpu_custom_call.1} parent=1 // pred_check_branch
      %109 = sbr.rel (%p107) target = $region25
    $region24: #{tpu_custom_call.1} parent=1 // pred_region
      %v110 = vld [vmem:[#allocation2] sm:$0xff]
      %111 = vadd.xlane.f32.xlu0 %v110
      %v112 = vpop.xlane.xlu0 %111
      %v113 = vrot.slane %v112, 4
      %v114 = vadd.f32 %v112, %v113
      %v115 = vrot.slane %v114, 2
      %v116 = vadd.f32 %v114, %v115
      %v117 = vrot.slane %v116, 1
      %v118 = vadd.f32 %v116, %v117
      %s119 = vtos %v118
      %s120 = scalar_lea.smem [#allocation8], 0
      %121 = sst [smem:[%s120]] %s119
    $region25: #{tpu_custom_call.1} parent=1 // pred_fallthru
      _
    // Predicated region
    $region26: #{tpu_custom_call.1} parent=1 // pred_check
      _
    $region27: #{tpu_custom_call.1} parent=1 // pred_check_branch
      %123 = sbr.rel (0) target = $region29
    $region28: #{tpu_custom_call.1} parent=1 // pred_region
      %s125 = ssub.s32 16, 16
      %126 = vsyncadd [#allocation5], %s125
      %129 = dma.smem_to_hbm [#allocation8], 16, %s2, [#allocation5]
    $region29: #{tpu_custom_call.1} parent=1 // pred_fallthru
      _
    // Predicated region
    $region30: #{tpu_custom_call.1} parent=1 // pred_check
      _
    $region31: #{tpu_custom_call.1} parent=1 // pred_check_branch
      %131 = sbr.rel (0) target = $region33
    $region32: #{tpu_custom_call.1} parent=1 // pred_region
      %132 = dma.done [#allocation5], 16
    $region33: #{tpu_custom_call.1} parent=1 // pred_fallthru
      _
    %133 = sfence
    %134 = vsyncpa [#allocation4], 1
    %135 = vsyncpa [#allocation7], 1
    %136 = vsyncpa [#allocation5], 1

</llo_original>
